<compile_context>
chip_gen: v6e
topology: v6e:2x2x1
jax: 0.10.0
libtpu: 0.0.40
codegen_flags: <defaults>
</compile_context>

<pallas_src>
import functools

import jax
import jax.numpy as jnp
from jax.experimental import pallas as pl
from jax.experimental.pallas import tpu as pltpu

_LANES = 128
_MAX_TILE_ROWS = 2048      # 2048 x 128 x 4B = 1 MiB per f32 input block
_ACC_ROWS = 8              # one f32 vreg accumulator (8, 128)


def _elementwise(x, *, gan_type, target_val, sign):
    """Per-element loss term in f32 (shared by the kernel and the tail path)."""
    x = x.astype(jnp.float32)
    if gan_type == "vanilla":
        # BCEWithLogitsLoss, numerically stable form:
        #   l = max(x, 0) - x * t + log(1 + exp(-|x|))
        t = jnp.float32(target_val)
        return jnp.maximum(x, 0.0) - x * t + jnp.log1p(jnp.exp(-jnp.abs(x)))
    if gan_type == "lsgan":
        d = x - jnp.float32(target_val)
        return d * d
    if gan_type == "wgan-gp":
        # -mean(x) if real else mean(x)  ->  sign * x, then mean
        return jnp.float32(sign) * x
    raise NotImplementedError(f"GAN type {gan_type} is not implemented")


def _gan_loss_kernel(x_ref, out_ref, acc_ref, *, gan_type, target_val, sign,
                     n_limit, tile_rows, steps, needs_mask):
    c = pl.program_id(0)          # "parallel" split axis (v7x megacore)
    i = pl.program_id(1)          # "arbitrary" reduction axis

    @pl.when(i == 0)
    def _():
        acc_ref[...] = jnp.zeros_like(acc_ref)

    def accumulate(masked):
        x = x_ref[...]
        elem = _elementwise(x, gan_type=gan_type, target_val=target_val,
                            sign=sign)
        if masked:
            rows = jax.lax.broadcasted_iota(jnp.int32, elem.shape, 0)
            cols = jax.lax.broadcasted_iota(jnp.int32, elem.shape, 1)
            tile_idx = c * steps + i
            flat = (tile_idx * tile_rows + rows) * _LANES + cols
            elem = jnp.where(flat < n_limit, elem, 0.0)
        # Fold (tile_rows, 128) into the (8, 128) accumulator: pure VPU adds.
        acc_ref[...] += jnp.sum(elem.reshape(-1, _ACC_ROWS, _LANES), axis=0)

    if needs_mask:
        # Masking is only ever needed on the final tile of the final split.
        is_last = jnp.logical_and(c == pl.num_programs(0) - 1,
                                  i == pl.num_programs(1) - 1)

        @pl.when(is_last)
        def _():
            accumulate(True)

        @pl.when(jnp.logical_not(is_last))
        def _():
            accumulate(False)
    else:
        accumulate(False)

    @pl.when(i == pl.num_programs(1) - 1)
    def _():
        # Single cross-lane/sublane (XLU) reduction, once per split.
        out_ref[...] = jnp.sum(acc_ref[...], keepdims=True)


def gan_loss(x, target_is_real, *, gan_type="vanilla", real_label_val=1.0,
             fake_label_val=0.0):
    """Pallas equivalent of GANLoss.forward(input, target_is_real).

    `target_is_real` must be a static Python bool (mirrors the PyTorch API,
    where it is a plain bool, not a tensor).
    """
    gan_type = gan_type.lower()
    if gan_type not in ("vanilla", "lsgan", "wgan-gp"):
        raise NotImplementedError(f"GAN type {gan_type} is not implemented")

    n = int(x.size)
    target_val = real_label_val if target_is_real else fake_label_val
    sign = -1.0 if target_is_real else 1.0
    ew = dict(gan_type=gan_type, target_val=float(target_val),
              sign=float(sign))

    x_flat = jnp.ravel(x)                       # free reshape, native dtype
    rows_full = n // _LANES
    rem = n - rows_full * _LANES

    if rows_full == 0:
        # TODO(synk): inputs smaller than one 128-lane row are reduced in
        # plain JAX (not worth a Pallas launch).
        return jnp.sum(_elementwise(x_flat, **ew)) / jnp.float32(n)

    if rem == 0:
        x2d = x_flat.reshape(rows_full, _LANES)     # pure reshape, no copy
        tail_sum = jnp.float32(0.0)
    else:
        # Rare unaligned case: bulk via Pallas, <128-element tail in JAX.
        main = rows_full * _LANES
        x2d = x_flat[:main].reshape(rows_full, _LANES)
        tail_sum = jnp.sum(_elementwise(x_flat[main:], **ew))

    # Tile geometry: big lane-dense blocks, rows a multiple of 8.
    tile_rows = min(_MAX_TILE_ROWS, pl.cdiv(rows_full, _ACC_ROWS) * _ACC_ROWS)
    tiles = pl.cdiv(rows_full, tile_rows)
    needs_mask = (rows_full % tile_rows) != 0

    # Split row-tiles across two cores (v7x megacore) when they divide evenly.
    if tiles >= 2 and tiles % 2 == 0:
        num_split, steps = 2, tiles // 2
    else:
        num_split, steps = 1, tiles

    kernel = functools.partial(
        _gan_loss_kernel,
        n_limit=rows_full * _LANES,
        tile_rows=tile_rows,
        steps=steps,
        needs_mask=needs_mask,
        **ew,
    )

    partials = pl.pallas_call(
        kernel,
        out_shape=jax.ShapeDtypeStruct((num_split, 1), jnp.float32),
        grid=(num_split, steps),
        in_specs=[pl.BlockSpec((tile_rows, _LANES),
                               lambda c, i: (c * steps + i, 0))],
        out_specs=pl.BlockSpec((1, 1), lambda c, i: (c, 0)),
        scratch_shapes=[pltpu.VMEM((_ACC_ROWS, _LANES), jnp.float32)],
        compiler_params=pltpu.CompilerParams(
            dimension_semantics=("parallel", "arbitrary")),
    )(x2d)

    total = jnp.sum(partials) + tail_sum
    return total / jnp.float32(n)


def _ref_gan_loss(x, target_is_real, gan_type, real_label_val=1.0,
                  fake_label_val=0.0):
    x = x.astype(jnp.float32)
    t = real_label_val if target_is_real else fake_label_val
    if gan_type == "vanilla":
        return jnp.mean(jnp.maximum(x, 0.0) - x * t
                        + jnp.log1p(jnp.exp(-jnp.abs(x))))
    elif gan_type == "lsgan":
        return jnp.mean((x - t) ** 2)
    else:  # wgan-gp
        return -jnp.mean(x) if target_is_real else jnp.mean(x)


if __name__ == "__main__":
    key = jax.random.PRNGKey(0)
    # Discriminator logits, NCHW as in PyTorch.
    x = jax.random.normal(key, (2, 4, 16, 16), dtype=jnp.float32)

    ok = True
    for gan_type in ("vanilla", "lsgan", "wgan-gp"):
        for target_is_real in (True, False):
            got = gan_loss(x, target_is_real, gan_type=gan_type)
            got = jax.block_until_ready(got)
            want = _ref_gan_loss(x, target_is_real, gan_type)
            if not jnp.allclose(got, want, rtol=1e-5, atol=1e-5):
                ok = False
                print(f"MISMATCH {gan_type} real={target_is_real}: "
                      f"{got} vs {want}")

    if ok:
        print("KERNEL_OK")
</pallas_src>

<mosaic_0001>
module attributes {stable_mosaic.version = 11 : i64} {
  func.func @_gan_loss_kernel(%arg0: i32, %arg1: i32, %arg2: memref<16x128xf32, #tpu.memory_space<vmem>>, %arg3: memref<1x1xf32, #tpu.memory_space<vmem>>, %arg4: memref<8x128xf32, #tpu.memory_space<vmem>>) attributes {dimension_semantics = [#tpu.dimension_semantics<parallel>, #tpu.dimension_semantics<arbitrary>], iteration_bounds = array<i64: 1, 1>, scalar_prefetch = 0 : i64, scratch_operands = 1 : i64, tpu.core_type = #tpu.core_type<tc>, window_params = [{transform_indices = @transform_0, window_bounds = array<i64: 16, 128>}, {transform_indices = @transform_1, window_bounds = array<i64: 1, 1>}]} {
    %c0_i32 = arith.constant 0 : i32
    %0 = arith.cmpi eq, %arg1, %c0_i32 : i32
    %1 = arith.extui %0 : i1 to i32
    %c0_i32_0 = arith.constant 0 : i32
    %2 = arith.cmpi ne, %1, %c0_i32_0 : i32
    scf.if %2 {
      %cst_11 = arith.constant 0.000000e+00 : f32
      %23 = vector.broadcast %cst_11 : f32 to vector<8x128xf32>
      %c0_12 = arith.constant 0 : index
      %c0_13 = arith.constant 0 : index
      %24 = vector.load %arg4[%c0_12, %c0_13] : memref<8x128xf32, #tpu.memory_space<vmem>>, vector<8x128xf32>
      tpu.vector_store %arg4[%c0_12, %c0_13], %23 {strides = array<i32>} : memref<8x128xf32, #tpu.memory_space<vmem>>, vector<8x128xf32>,
    } else {
    }
    %c0 = arith.constant 0 : index
    %c0_1 = arith.constant 0 : index
    %3 = vector.load %arg2[%c0, %c0_1] : memref<16x128xf32, #tpu.memory_space<vmem>>, vector<16x128xf32>
    %cst = arith.constant 0.000000e+00 : f32
    %4 = vector.broadcast %cst : f32 to vector<16x128xf32>
    %5 = arith.maximumf %3, %4 : vector<16x128xf32>
    %cst_2 = arith.constant 1.000000e+00 : f32
    %6 = vector.broadcast %cst_2 : f32 to vector<16x128xf32>
    %7 = arith.mulf %3, %6 : vector<16x128xf32>
    %8 = arith.subf %5, %7 : vector<16x128xf32>
    %9 = math.absf %3 : vector<16x128xf32>
    %cst_3 = arith.constant 0.000000e+00 : f32
    %10 = vector.broadcast %cst_3 : f32 to vector<16x128xf32>
    %11 = arith.subf %10, %9 : vector<16x128xf32>
    %12 = math.exp %11 : vector<16x128xf32>
    %13 = math.log1p %12 : vector<16x128xf32>
    %14 = arith.addf %8, %13 : vector<16x128xf32>
    %c0_4 = arith.constant 0 : index
    %c0_5 = arith.constant 0 : index
    %15 = vector.load %arg4[%c0_4, %c0_5] : memref<8x128xf32, #tpu.memory_space<vmem>>, vector<8x128xf32>
    %16 = vector.shape_cast %14 : vector<16x128xf32> to vector<2x8x128xf32>
    %cst_6 = arith.constant dense<0.000000e+00> : vector<8x128xf32>
    %17 = vector.multi_reduction <add>, %16, %cst_6 [0] : vector<2x8x128xf32> to vector<8x128xf32>
    %18 = arith.addf %15, %17 : vector<8x128xf32>
    %c0_7 = arith.constant 0 : index
    %c0_8 = arith.constant 0 : index
    %19 = vector.load %arg4[%c0_7, %c0_8] : memref<8x128xf32, #tpu.memory_space<vmem>>, vector<8x128xf32>
    tpu.vector_store %arg4[%c0_7, %c0_8], %18 {strides = array<i32>} : memref<8x128xf32, #tpu.memory_space<vmem>>, vector<8x128xf32>,
    %c0_i32_9 = arith.constant 0 : i32
    %20 = arith.cmpi eq, %arg1, %c0_i32_9 : i32
    %21 = arith.extui %20 : i1 to i32
    %c0_i32_10 = arith.constant 0 : i32
    %22 = arith.cmpi ne, %21, %c0_i32_10 : i32
    scf.if %22 {
      %c0_11 = arith.constant 0 : index
      %c0_12 = arith.constant 0 : index
      %23 = vector.load %arg4[%c0_11, %c0_12] : memref<8x128xf32, #tpu.memory_space<vmem>>, vector<8x128xf32>
      %24 = vector.shape_cast %23 : vector<8x128xf32> to vector<1x8x128xf32>
      %cst_13 = arith.constant dense<0.000000e+00> : vector<1xf32>
      %25 = vector.multi_reduction <add>, %24, %cst_13 [1, 2] : vector<1x8x128xf32> to vector<1xf32>
      %26 = vector.shape_cast %25 : vector<1xf32> to vector<1x1x1xf32>
      %27 = vector.extract %26[0, 0, 0] : f32 from vector<1x1x1xf32>
      %28 = vector.broadcast %27 : f32 to vector<1x1xf32>
      %c0_14 = arith.constant 0 : index
      %c0_15 = arith.constant 0 : index
      %29 = vector.load %arg3[%c0_14, %c0_15] : memref<1x1xf32, #tpu.memory_space<vmem>>, vector<1x1xf32>
      tpu.vector_store %arg3[%c0_14, %c0_15], %28 {strides = array<i32>} : memref<1x1xf32, #tpu.memory_space<vmem>>, vector<1x1xf32>,
    } else {
    }
    return
  }
  func.func @transform_0(%arg0: i32, %arg1: i32) -> (i32, i32) {
    %c1_i32 = arith.constant 1 : i32
    %0 = arith.muli %arg0, %c1_i32 : i32
    %1 = arith.addi %0, %arg1 : i32
    %c0_i32 = arith.constant 0 : i32
    %c0_i32_0 = arith.constant 0 : i32
    return %1, %c0_i32 : i32, i32
  }
  func.func @transform_1(%arg0: i32, %arg1: i32) -> (i32, i32) {
    %c0_i32 = arith.constant 0 : i32
    %c0_i32_0 = arith.constant 0 : i32
    return %arg0, %c0_i32 : i32, i32
  }
}

</mosaic_0001>

<llo_original>
// kernel: tpu_custom_call.1
$region0: #{tpu_custom_call.1}
  #allocation0 [shape = 'u32[]', space=smem, size = 0x4, offset = 0x4, fixed_abs, tag = 'smem constant byte address 0x4 - core index']
  #allocation1 [shape = 'u32[144,128]{1,0:T(1,128)}', space=vmem, size = 0x12000, scoped, tag = 'internal scratch']
  #allocation2 [shape = 'f32[8,128]{1,0:T(8,128)}', space=vmem, size = 0x1000, scoped, tag = 'scratch operand']
  %s0 = inlined_call_operand.hbm [shape: f32[16,128], index: 0, kind: input, shape index: {}]
  %s1 = inlined_call_operand.hbm [shape: f32[1,1], index: 1, kind: output, shape index: {}]
  %s2 = sld [smem:[#allocation0]]
  $region26: #{tpu_custom_call.1} parent=0
    _
  %s4 = ssub.s32 1, %s2
  %s5 = scalar_select 0, %s4, %s2
  $region1: #{tpu_custom_call.1} parent=0
    #allocation3 [shape = 'u8[8192]{0}', space=vmem, size = 0x2000, scoped, tag = 'input window, operand 0, single buffered']
    #allocation4 [shape = 's32[1]{0}', space=sflag, size = 0x4, scoped, tag = 'scoped memory for tpu_custom_call.1']
    #allocation5 [shape = 's32[1]{0}', space=sflag, size = 0x4, scoped, tag = 'scoped memory for tpu_custom_call.1']
    #allocation6 [shape = 'u8[512]{0}', space=vmem, size = 0x400, scoped, tag = 'output window, operand 0, single buffered']
    %6 = vsyncpa [#allocation4], 0
    %7 = vsyncpa [#allocation5], 0
    // Predicated region
    $region2: #{tpu_custom_call.1} parent=1 // pred_check
      _
    $region3: #{tpu_custom_call.1} parent=1 // pred_check_branch
      %9 = sbr.rel (0) target = $region5
    $region4: #{tpu_custom_call.1} parent=1 // pred_region
      %s10 = sadd.s32 0, 0
      %s11 = smul.u32 2, %s10
      %s13 = ssub.s32 256, 256
      %14 = vsyncadd [#allocation4], %s13
      %s15 = smul.addr %s11, 128
      %s16 = scalar_lea.hbm %s0, %s15
      %s17 = sshll.u32 [#allocation3], 4
      %s18 = int_to_ptr.vmem [resolvable:$true] %s17
      %23 = dma.hbm_to_vmem [thread:$0]  %s16, 256, %s18, [#allocation4], 128, 128, 8
    $region5: #{tpu_custom_call.1} parent=1 // pred_fallthru
      _
    // Predicated region
    $region6: #{tpu_custom_call.1} parent=1 // pred_check
      _
    $region7: #{tpu_custom_call.1} parent=1 // pred_check_branch
      %25 = sbr.rel (0) target = $region9
    $region8: #{tpu_custom_call.1} parent=1 // pred_region
      %26 = dma.done [#allocation4], 256
    $region9: #{tpu_custom_call.1} parent=1 // pred_fallthru
      _
    %s27 = sadd.s32 0, 0
    %s28 = smul.u32 2, %s27
    %p29 = scmp.eq.s32.totalorder 0, 0
    // Predicated region
    $region10: #{tpu_custom_call.1} parent=1 // pred_check
      %p30 = pneg %p29
    $region11: #{tpu_custom_call.1} parent=1 // pred_check_branch
      %32 = sbr.rel (%p30) target = $region13
    $region12: #{tpu_custom_call.1} parent=1 // pred_region
      %33 = vst [vmem:[#allocation2] sm:$0xff] 0.0
    $region13: #{tpu_custom_call.1} parent=1 // pred_fallthru
      _
    %v34 = vld [vmem:[#allocation3] sm:$0xff]
    %v35 = vld [vmem:[#allocation3 + $0x8] sm:$0xff]
    %v36 = vmax.f32 %v34, 0.0
    %v37 = vmax.f32 %v35, 0.0
    %v38 = vsub.f32 %v36, %v34
    %v39 = vsub.f32 %v37, %v35
    %v40 = vand.u32 2147483647, %v34
    %v41 = vand.u32 2147483647, %v35
    %v42 = vsub.f32 0.0, %v40
    %v43 = vsub.f32 0.0, %v41
    %v44 = vmul.f32 %v42, 1.442695
    %v45 = vpow.pop %v44
    %v46 = vmul.f32 %v43, 1.442695
    %v47 = vpow.pop %v46
    %v48 = vadd.f32 %v45, 1.0
    %v49 = vlog2.pop %v48
    %v50 = vmul.f32 %v49, 0.6931472
    %v51 = vmul.f32 -0.5, %v45
    %v52 = vadd.f32 %v51, 1.0
    %v53 = vmul.f32 %v52, %v45
    %v54 = vand.u32 2147483647, %v45
    %vm55 = vcmp.lt.f32.partialorder %v54, 0.0004427343
    %v56 = vsel %vm55, %v53, %v50
    %v57 = vadd.f32 %v47, 1.0
    %v58 = vlog2.pop %v57
    %v59 = vmul.f32 %v58, 0.6931472
    %v60 = vmul.f32 -0.5, %v47
    %v61 = vadd.f32 %v60, 1.0
    %v62 = vmul.f32 %v61, %v47
    %v63 = vand.u32 2147483647, %v47
    %vm64 = vcmp.lt.f32.partialorder %v63, 0.0004427343
    %v65 = vsel %vm64, %v62, %v59
    %v66 = vadd.f32 %v38, %v56
    %v67 = vadd.f32 %v39, %v65
    %v68 = vld [vmem:[#allocation2] sm:$0xff]
    %v69 = vadd.f32 %v66, %v67
    %v70 = vadd.f32 %v68, %v69
    %71 = vst [vmem:[#allocation2] sm:$0xff] %v70
    // Predicated region
    $region14: #{tpu_custom_call.1} parent=1 // pred_check
      %p72 = pneg %p29
    $region15: #{tpu_custom_call.1} parent=1 // pred_check_branch
      %74 = sbr.rel (%p72) target = $region17
    $region16: #{tpu_custom_call.1} parent=1 // pred_region
      %v75 = vld [vmem:[#allocation2] sm:$0xff]
      %76 = vadd.xlane.f32.xlu0 %v75
      %v77 = vpop.xlane.xlu0 %76
      %v78 = vrot.slane %v77, 4
      %v79 = vadd.f32 %v77, %v78
      %v80 = vrot.slane %v79, 2
      %v81 = vadd.f32 %v79, %v80
      %v82 = vrot.slane %v81, 1
      %v83 = vadd.f32 %v81, %v82
      %s84 = vtos %v83
      %v85 = vstv %s84
      %vm86 = vcmask 0
      %87 = vst.msk [vmem:[#allocation6] sm:$0x1] %vm86, %v85
    $region17: #{tpu_custom_call.1} parent=1 // pred_fallthru
      _
    // Predicated region
    $region18: #{tpu_custom_call.1} parent=1 // pred_check
      _
    $region19: #{tpu_custom_call.1} parent=1 // pred_check_branch
      %89 = sbr.rel (0) target = $region21
    $region20: #{tpu_custom_call.1} parent=1 // pred_region
      %s91 = ssub.s32 16, 16
      %92 = vsyncadd [#allocation5], %s91
      %s94 = sshll.u32 [#allocation6], 4
      %s95 = int_to_ptr.vmem [resolvable:$true] %s94
      %97 = dma.vmem_to_hbm [thread:$0]  %s95, 16, %s1, [#allocation5]
    $region21: #{tpu_custom_call.1} parent=1 // pred_fallthru
      _
    // Predicated region
    $region22: #{tpu_custom_call.1} parent=1 // pred_check
      _
    $region23: #{tpu_custom_call.1} parent=1 // pred_check_branch
      %99 = sbr.rel (0) target = $region25
    $region24: #{tpu_custom_call.1} parent=1 // pred_region
      %100 = dma.done [#allocation5], 16
    $region25: #{tpu_custom_call.1} parent=1 // pred_fallthru
      _
    %101 = vsyncpa [#allocation4], 1
    %102 = vsyncpa [#allocation5], 1

</llo_original>
